<compile_context>
chip_gen: v5e
topology: v5e:2x2
jax: 0.10.0
libtpu: 0.0.40
codegen_flags: <defaults>
</compile_context>

<pallas_src>
from functools import partial

import jax
import jax.numpy as jnp
from jax.experimental import pallas as pl
from jax.experimental.pallas import tpu as pltpu


def _round_up(x, m):
    return ((x + m - 1) // m) * m


def _cdiv(a, b):
    return -(-a // b)


def _choose_tile(n_rows, k, itemsize, budget_bytes=12 * 1024 * 1024):
    """Row-tile for a (n_rows, k) logits stream plus its (n_rows, 1) int32 labels.

    Lane-aware accounting: the logits tile occupies round_up(k, 128) lanes and the
    label column one 128-lane int32 vreg column; both are double-buffered by the
    BlockSpec pipeline (factor 2).
    """
    k_lanes = _round_up(max(k, 1), 128)
    per_row = 2 * (k_lanes * itemsize + 128 * 4)
    t = budget_bytes // max(per_row, 1)
    t = max(8, min(4096, (t // 8) * 8))
    if n_rows <= t:
        return n_rows, 1          # single full-array block (exact dims -> always legal)
    return t, _cdiv(n_rows, t)    # edge block is masked in-kernel


def _make_fused_ce_kernel(n1, n2, t1, t2):
    """Kernel closure over the static row counts / tile sizes of both segments."""

    def kernel(pred_ref, plab_ref, wts_ref, rlab_ref, out_ref):
        i = pl.program_id(0)

        @pl.when(i == 0)
        def _init():
            out_ref[...] = jnp.zeros_like(out_ref)

        def seg_stats(x_ref, lab_ref, row0, n_rows):
            x = x_ref[...].astype(jnp.float32)                 # (T, K)
            lab = lab_ref[...]                                 # (T, 1) int32
            t, k = x.shape
            row = row0 + jax.lax.broadcasted_iota(jnp.int32, (t, 1), 0)
            valid = row < n_rows                               # masks edge / overrun rows

            # log-softmax via max-shifted logsumexp (per-segment K -> no lane padding
            # enters the reductions; garbage in invalid rows is select-masked below).
            m = jnp.max(x, axis=-1, keepdims=True)                              # (T, 1)
            lse = m + jnp.log(jnp.sum(jnp.exp(x - m), axis=-1, keepdims=True))  # (T, 1)

            # gather the label logit via an iota-built one-hot (no dynamic gather on TPU)
            col = jax.lax.broadcasted_iota(jnp.int32, (t, k), 1)                # (T, K)
            label_logit = jnp.sum(jnp.where(col == lab, x, 0.0),
                                  axis=-1, keepdims=True)                       # (T, 1)

            nll = lse - label_logit                                             # (T, 1)
            # correct  <=>  label logit attains the row max (ties count as correct)
            correct = jnp.logical_and(valid, label_logit >= m)                  # (T, 1)

            loss_sum = jnp.sum(jnp.where(valid, nll, 0.0), axis=0, keepdims=True)    # (1,1)
            corr_sum = jnp.sum(jnp.where(correct, 1.0, 0.0), axis=0, keepdims=True)  # (1,1)
            return loss_sum, corr_sum

        l1, c1 = seg_stats(pred_ref, plab_ref, i * t1, n1)
        l2, c2 = seg_stats(wts_ref, rlab_ref, i * t2, n2)

        # scatter the four scalars into lanes [loss_cls, loss_reg, corr_cls, corr_reg]
        lane = jax.lax.broadcasted_iota(jnp.int32, (1, 4), 1)
        upd = (jnp.where(lane == 0, l1, 0.0) + jnp.where(lane == 1, l2, 0.0) +
               jnp.where(lane == 2, c1, 0.0) + jnp.where(lane == 3, c2, 0.0))

        # accumulate directly in the resident output block (same block index every step)
        out_ref[...] += upd

    return kernel


def _fused_cross_entropy(cls_logits, cls_labels, reg_logits, reg_labels):
    """Fused row-wise CE + accuracy for two logits/labels problems (one pallas_call).

    cls_logits: (N1, K1), cls_labels: (N1,)
    reg_logits: (N2, K2), reg_labels: (N2,)
    Returns (cls_loss_mean, cls_acc, reg_loss_mean, reg_acc) as f32 scalars.
    """
    n1, k1 = cls_logits.shape
    n2, k2 = reg_logits.shape

    plab = cls_labels.reshape(n1, 1).astype(jnp.int32)
    rlab = reg_labels.reshape(n2, 1).astype(jnp.int32)

    it1 = jnp.dtype(cls_logits.dtype).itemsize
    it2 = jnp.dtype(reg_logits.dtype).itemsize
    t1, g1 = _choose_tile(n1, k1, it1)
    t2, g2 = _choose_tile(n2, k2, it2)
    grid_n = max(g1, g2)

    cost = pl.CostEstimate(
        flops=int(6 * (n1 * k1 + n2 * k2)),
        transcendentals=int(n1 * (k1 + 1) + n2 * (k2 + 1)),
        bytes_accessed=int(n1 * k1 * it1 + n2 * k2 * it2 + 4 * (n1 + n2) + 16),
    )

    sums = pl.pallas_call(
        _make_fused_ce_kernel(n1, n2, t1, t2),
        out_shape=jax.ShapeDtypeStruct((1, 4), jnp.float32),
        grid_spec=pltpu.PrefetchScalarGridSpec(
            num_scalar_prefetch=0,
            grid=(grid_n,),
            in_specs=[
                # clamp each segment's block index to its own extent; steps past it
                # re-see the last block and are fully masked in-kernel
                pl.BlockSpec((t1, k1), lambda i: (jnp.minimum(i, g1 - 1), 0)),
                pl.BlockSpec((t1, 1), lambda i: (jnp.minimum(i, g1 - 1), 0)),
                pl.BlockSpec((t2, k2), lambda i: (jnp.minimum(i, g2 - 1), 0)),
                pl.BlockSpec((t2, 1), lambda i: (jnp.minimum(i, g2 - 1), 0)),
            ],
            out_specs=pl.BlockSpec((1, 4), lambda i: (0, 0)),
        ),
        compiler_params=pltpu.CompilerParams(
            dimension_semantics=("arbitrary",),       # output accumulator revisited
            vmem_limit_bytes=32 * 1024 * 1024,        # safe on v5e/v6e/v7x
        ),
        cost_estimate=cost,
    )(cls_logits, plab, reg_logits, rlab)

    cls_loss = sums[0, 0] / jnp.float32(n1)
    r_loss = sums[0, 1] / jnp.float32(n2)
    acc = sums[0, 2] / jnp.float32(n1)
    racc = sums[0, 3] / jnp.float32(n2)
    return cls_loss, acc, r_loss, racc


@partial(jax.jit,
         static_argnames=("loss_type", "loss_margin", "iter_counter", "pretrain_step"))
def attention_cross_entropy_loss(pred, label, wts, rlabel,
                                 loss_type="default", loss_margin=1.0,
                                 iter_counter=0, pretrain_step=2000):
    """Forward pass of AttentionCrossEntropyLoss.

    pred:   (B, Ncls) logits
    label:  (B,) int
    wts:    (B, A) or (B, C, A) attention logits (class dim = A)
    rlabel: (B,) or (B, 60) int rotation labels
    Returns (loss, cls_loss, r_loss, acc, racc).
    """
    if wts.ndim == 3:
        b, c, a = wts.shape
        if c <= rlabel.shape[1]:
            rlabel_t = rlabel[:, :c]
        else:
            rlabel_t = jnp.tile(rlabel, (1, 10))[:, :c]
        # torch: CE(wts.transpose(1, 2) [B, A, C], rlabel [B, C]) == row-wise CE over A
        wts_flat = wts.reshape(b * c, a)
        rlab_flat = rlabel_t.reshape(-1)
    else:
        wts_flat = wts
        rlab_flat = rlabel.reshape(-1)

    cls_loss, acc, r_loss, racc = _fused_cross_entropy(pred, label, wts_flat, rlab_flat)

    m = loss_margin
    if loss_type == "schedule":
        cls_loss_wts = min(float(iter_counter) / pretrain_step, 1.0)
        loss = cls_loss_wts * cls_loss + (m + 1.0 - cls_loss_wts) * r_loss
    elif loss_type == "default":
        loss = cls_loss + m * r_loss
    elif loss_type == "no_reg":
        loss = cls_loss
    else:
        raise NotImplementedError(f"{loss_type} is not Implemented!")

    # TODO(synk): torch module increments self.iter_counter when training (stateful);
    # pass iter_counter explicitly instead.
    return loss, cls_loss, r_loss, acc, racc


def _ref_ce(logits, labels):
    """Plain-JAX reference (mean CE + accuracy) for verification."""
    logp = jax.nn.log_softmax(logits.astype(jnp.float32), axis=-1)
    nll = -jnp.take_along_axis(logp, labels[:, None].astype(jnp.int32), axis=-1)[:, 0]
    acc = jnp.mean((jnp.argmax(logits, axis=-1) == labels).astype(jnp.float32))
    return jnp.mean(nll), acc


if __name__ == "__main__":
    key = jax.random.PRNGKey(0)
    k1, k2, k3, k4 = jax.random.split(key, 4)

    B, NCLS = 2, 10      # classification logits
    C, A = 4, 8          # attention: C feature groups, A rotation anchors

    pred = jax.random.normal(k1, (B, NCLS), dtype=jnp.float32)
    label = jax.random.randint(k2, (B,), 0, NCLS, dtype=jnp.int32)
    wts = jax.random.normal(k3, (B, C, A), dtype=jnp.float32)
    rlabel = jax.random.randint(k4, (B, 60), 0, A, dtype=jnp.int32)

    out = attention_cross_entropy_loss(
        pred, label, wts, rlabel, loss_type="default", loss_margin=1.0)
    out = jax.block_until_ready(out)
    loss, cls_loss, r_loss, acc, racc = out

    # sanity: finite scalars + match a plain-JAX reference
    assert all(bool(jnp.isfinite(v)) for v in (loss, cls_loss, r_loss, acc, racc))
    ref_cls, ref_acc = _ref_ce(pred, label)
    ref_r, ref_racc = _ref_ce(wts.reshape(B * C, A), rlabel[:, :C].reshape(-1))
    assert bool(jnp.allclose(cls_loss, ref_cls, atol=1e-4, rtol=1e-4))
    assert bool(jnp.allclose(r_loss, ref_r, atol=1e-4, rtol=1e-4))
    assert bool(jnp.allclose(acc, ref_acc, atol=1e-6))
    assert bool(jnp.allclose(racc, ref_racc, atol=1e-6))
    assert bool(jnp.allclose(loss, ref_cls + 1.0 * ref_r, atol=1e-4, rtol=1e-4))

    print("KERNEL_OK")
</pallas_src>

<mosaic_0001>
module attributes {stable_mosaic.version = 11 : i64} {
  func.func @kernel(%arg0: i32, %arg1: memref<2x10xf32, #tpu.memory_space<vmem>>, %arg2: memref<2x1xi32, #tpu.memory_space<vmem>>, %arg3: memref<8x8xf32, #tpu.memory_space<vmem>>, %arg4: memref<8x1xi32, #tpu.memory_space<vmem>>, %arg5: memref<1x4xf32, #tpu.memory_space<vmem>>) attributes {dimension_semantics = [#tpu.dimension_semantics<arbitrary>], iteration_bounds = array<i64: 1>, scalar_prefetch = 0 : i64, scratch_operands = 0 : i64, tpu.core_type = #tpu.core_type<tc>, window_params = [{transform_indices = @transform_0, window_bounds = array<i64: 2, 10>}, {transform_indices = @transform_1, window_bounds = array<i64: 2, 1>}, {transform_indices = @transform_2, window_bounds = array<i64: 8, 8>}, {transform_indices = @transform_3, window_bounds = array<i64: 8, 1>}, {pipeline_mode = #tpu.pipeline_mode<synchronous>, transform_indices = @transform_4, window_bounds = array<i64: 1, 4>}]} {
    %c0_i32 = arith.constant 0 : i32
    %0 = arith.cmpi eq, %arg0, %c0_i32 : i32
    %1 = arith.extui %0 : i1 to i32
    %c0_i32_0 = arith.constant 0 : i32
    %2 = arith.cmpi ne, %1, %c0_i32_0 : i32
    scf.if %2 {
      %cst_37 = arith.constant 0.000000e+00 : f32
      %106 = vector.broadcast %cst_37 : f32 to vector<1x4xf32>
      %c0_38 = arith.constant 0 : index
      %c0_39 = arith.constant 0 : index
      %107 = vector.load %arg5[%c0_38, %c0_39] : memref<1x4xf32, #tpu.memory_space<vmem>>, vector<1x4xf32>
      tpu.vector_store %arg5[%c0_38, %c0_39], %106 {strides = array<i32>} : memref<1x4xf32, #tpu.memory_space<vmem>>, vector<1x4xf32>,
    } else {
    }
    %c2_i32 = arith.constant 2 : i32
    %3 = arith.muli %arg0, %c2_i32 : i32
    %c0 = arith.constant 0 : index
    %c0_1 = arith.constant 0 : index
    %4 = vector.load %arg1[%c0, %c0_1] : memref<2x10xf32, #tpu.memory_space<vmem>>, vector<2x10xf32>
    %c0_2 = arith.constant 0 : index
    %c0_3 = arith.constant 0 : index
    %5 = vector.load %arg2[%c0_2, %c0_3] : memref<2x1xi32, #tpu.memory_space<vmem>>, vector<2x1xi32>
    %6 = tpu.iota {dimensions = array<i32: 0>} : vector<2x1xi32>
    %7 = vector.broadcast %3 : i32 to vector<2x1xi32>
    %8 = arith.addi %7, %6 : vector<2x1xi32>
    %c2_i32_4 = arith.constant 2 : i32
    %9 = vector.broadcast %c2_i32_4 : i32 to vector<2x1xi32>
    %10 = arith.cmpi slt, %8, %9 : vector<2x1xi32>
    %cst = arith.constant dense<0xFF800000> : vector<2xf32>
    %11 = vector.multi_reduction <maximumf>, %4, %cst [1] : vector<2x10xf32> to vector<2xf32>
    %12 = vector.shape_cast %11 : vector<2xf32> to vector<2x1xf32>
    %13 = vector.broadcast %12 : vector<2x1xf32> to vector<2x10xf32>
    %14 = arith.subf %4, %13 : vector<2x10xf32>
    %15 = math.exp %14 : vector<2x10xf32>
    %cst_5 = arith.constant dense<0.000000e+00> : vector<2xf32>
    %16 = vector.multi_reduction <add>, %15, %cst_5 [1] : vector<2x10xf32> to vector<2xf32>
    %17 = vector.shape_cast %16 : vector<2xf32> to vector<2x1xf32>
    %18 = math.log %17 : vector<2x1xf32>
    %19 = arith.addf %12, %18 : vector<2x1xf32>
    %20 = tpu.iota {dimensions = array<i32: 1>} : vector<2x10xi32>
    %21 = vector.broadcast %5 : vector<2x1xi32> to vector<2x10xi32>
    %22 = arith.cmpi eq, %20, %21 : vector<2x10xi32>
    %cst_6 = arith.constant 0.000000e+00 : f32
    %23 = vector.broadcast %cst_6 : f32 to vector<2x10xf32>
    %24 = arith.select %22, %4, %23 : vector<2x10xi1>, vector<2x10xf32>
    %cst_7 = arith.constant dense<0.000000e+00> : vector<2xf32>
    %25 = vector.multi_reduction <add>, %24, %cst_7 [1] : vector<2x10xf32> to vector<2xf32>
    %26 = vector.shape_cast %25 : vector<2xf32> to vector<2x1xf32>
    %27 = arith.subf %19, %26 : vector<2x1xf32>
    %28 = arith.cmpf oge, %26, %12 : vector<2x1xf32>
    %29 = arith.andi %10, %28 : vector<2x1xi1>
    %cst_8 = arith.constant 0.000000e+00 : f32
    %30 = vector.broadcast %cst_8 : f32 to vector<2x1xf32>
    %31 = arith.select %10, %27, %30 : vector<2x1xi1>, vector<2x1xf32>
    %cst_9 = arith.constant dense<0.000000e+00> : vector<1xf32>
    %32 = vector.multi_reduction <add>, %31, %cst_9 [0] : vector<2x1xf32> to vector<1xf32>
    %33 = vector.shape_cast %32 : vector<1xf32> to vector<1x1xf32>
    %cst_10 = arith.constant 1.000000e+00 : f32
    %cst_11 = arith.constant 0.000000e+00 : f32
    %34 = vector.broadcast %cst_10 : f32 to vector<2x1xf32>
    %35 = vector.broadcast %cst_11 : f32 to vector<2x1xf32>
    %36 = arith.select %29, %34, %35 : vector<2x1xi1>, vector<2x1xf32>
    %cst_12 = arith.constant dense<0.000000e+00> : vector<1xf32>
    %37 = vector.multi_reduction <add>, %36, %cst_12 [0] : vector<2x1xf32> to vector<1xf32>
    %38 = vector.shape_cast %37 : vector<1xf32> to vector<1x1xf32>
    %c8_i32 = arith.constant 8 : i32
    %39 = arith.muli %arg0, %c8_i32 : i32
    %c0_13 = arith.constant 0 : index
    %c0_14 = arith.constant 0 : index
    %40 = vector.load %arg3[%c0_13, %c0_14] : memref<8x8xf32, #tpu.memory_space<vmem>>, vector<8x8xf32>
    %c0_15 = arith.constant 0 : index
    %c0_16 = arith.constant 0 : index
    %41 = vector.load %arg4[%c0_15, %c0_16] : memref<8x1xi32, #tpu.memory_space<vmem>>, vector<8x1xi32>
    %42 = tpu.iota {dimensions = array<i32: 0>} : vector<8x1xi32>
    %43 = vector.broadcast %39 : i32 to vector<8x1xi32>
    %44 = arith.addi %43, %42 : vector<8x1xi32>
    %c8_i32_17 = arith.constant 8 : i32
    %45 = vector.broadcast %c8_i32_17 : i32 to vector<8x1xi32>
    %46 = arith.cmpi slt, %44, %45 : vector<8x1xi32>
    %cst_18 = arith.constant dense<0xFF800000> : vector<8xf32>
    %47 = vector.multi_reduction <maximumf>, %40, %cst_18 [1] : vector<8x8xf32> to vector<8xf32>
    %48 = vector.shape_cast %47 : vector<8xf32> to vector<8x1xf32>
    %49 = vector.broadcast %48 : vector<8x1xf32> to vector<8x8xf32>
    %50 = arith.subf %40, %49 : vector<8x8xf32>
    %51 = math.exp %50 : vector<8x8xf32>
    %cst_19 = arith.constant dense<0.000000e+00> : vector<8xf32>
    %52 = vector.multi_reduction <add>, %51, %cst_19 [1] : vector<8x8xf32> to vector<8xf32>
    %53 = vector.shape_cast %52 : vector<8xf32> to vector<8x1xf32>
    %54 = math.log %53 : vector<8x1xf32>
    %55 = arith.addf %48, %54 : vector<8x1xf32>
    %56 = tpu.iota {dimensions = array<i32: 1>} : vector<8x8xi32>
    %57 = vector.broadcast %41 : vector<8x1xi32> to vector<8x8xi32>
    %58 = arith.cmpi eq, %56, %57 : vector<8x8xi32>
    %cst_20 = arith.constant 0.000000e+00 : f32
    %59 = vector.broadcast %cst_20 : f32 to vector<8x8xf32>
    %60 = arith.select %58, %40, %59 : vector<8x8xi1>, vector<8x8xf32>
    %cst_21 = arith.constant dense<0.000000e+00> : vector<8xf32>
    %61 = vector.multi_reduction <add>, %60, %cst_21 [1] : vector<8x8xf32> to vector<8xf32>
    %62 = vector.shape_cast %61 : vector<8xf32> to vector<8x1xf32>
    %63 = arith.subf %55, %62 : vector<8x1xf32>
    %64 = arith.cmpf oge, %62, %48 : vector<8x1xf32>
    %65 = arith.andi %46, %64 : vector<8x1xi1>
    %cst_22 = arith.constant 0.000000e+00 : f32
    %66 = vector.broadcast %cst_22 : f32 to vector<8x1xf32>
    %67 = arith.select %46, %63, %66 : vector<8x1xi1>, vector<8x1xf32>
    %cst_23 = arith.constant dense<0.000000e+00> : vector<1xf32>
    %68 = vector.multi_reduction <add>, %67, %cst_23 [0] : vector<8x1xf32> to vector<1xf32>
    %69 = vector.shape_cast %68 : vector<1xf32> to vector<1x1xf32>
    %cst_24 = arith.constant 1.000000e+00 : f32
    %cst_25 = arith.constant 0.000000e+00 : f32
    %70 = vector.broadcast %cst_24 : f32 to vector<8x1xf32>
    %71 = vector.broadcast %cst_25 : f32 to vector<8x1xf32>
    %72 = arith.select %65, %70, %71 : vector<8x1xi1>, vector<8x1xf32>
    %cst_26 = arith.constant dense<0.000000e+00> : vector<1xf32>
    %73 = vector.multi_reduction <add>, %72, %cst_26 [0] : vector<8x1xf32> to vector<1xf32>
    %74 = vector.shape_cast %73 : vector<1xf32> to vector<1x1xf32>
    %75 = tpu.iota {dimensions = array<i32: 1>} : vector<1x4xi32>
    %c0_i32_27 = arith.constant 0 : i32
    %76 = vector.broadcast %c0_i32_27 : i32 to vector<1x4xi32>
    %77 = arith.cmpi eq, %75, %76 : vector<1x4xi32>
    %cst_28 = arith.constant 0.000000e+00 : f32
    %78 = vector.shape_cast %33 : vector<1x1xf32> to vector<1x1xf32>
    %79 = vector.broadcast %78 : vector<1x1xf32> to vector<1x4xf32>
    %80 = vector.broadcast %cst_28 : f32 to vector<1x4xf32>
    %81 = arith.select %77, %79, %80 : vector<1x4xi1>, vector<1x4xf32>
    %c1_i32 = arith.constant 1 : i32
    %82 = vector.broadcast %c1_i32 : i32 to vector<1x4xi32>
    %83 = arith.cmpi eq, %75, %82 : vector<1x4xi32>
    %cst_29 = arith.constant 0.000000e+00 : f32
    %84 = vector.shape_cast %69 : vector<1x1xf32> to vector<1x1xf32>
    %85 = vector.broadcast %84 : vector<1x1xf32> to vector<1x4xf32>
    %86 = vector.broadcast %cst_29 : f32 to vector<1x4xf32>
    %87 = arith.select %83, %85, %86 : vector<1x4xi1>, vector<1x4xf32>
    %88 = arith.addf %81, %87 : vector<1x4xf32>
    %c2_i32_30 = arith.constant 2 : i32
    %89 = vector.broadcast %c2_i32_30 : i32 to vector<1x4xi32>
    %90 = arith.cmpi eq, %75, %89 : vector<1x4xi32>
    %cst_31 = arith.constant 0.000000e+00 : f32
    %91 = vector.shape_cast %38 : vector<1x1xf32> to vector<1x1xf32>
    %92 = vector.broadcast %91 : vector<1x1xf32> to vector<1x4xf32>
    %93 = vector.broadcast %cst_31 : f32 to vector<1x4xf32>
    %94 = arith.select %90, %92, %93 : vector<1x4xi1>, vector<1x4xf32>
    %95 = arith.addf %88, %94 : vector<1x4xf32>
    %c3_i32 = arith.constant 3 : i32
    %96 = vector.broadcast %c3_i32 : i32 to vector<1x4xi32>
    %97 = arith.cmpi eq, %75, %96 : vector<1x4xi32>
    %cst_32 = arith.constant 0.000000e+00 : f32
    %98 = vector.shape_cast %74 : vector<1x1xf32> to vector<1x1xf32>
    %99 = vector.broadcast %98 : vector<1x1xf32> to vector<1x4xf32>
    %100 = vector.broadcast %cst_32 : f32 to vector<1x4xf32>
    %101 = arith.select %97, %99, %100 : vector<1x4xi1>, vector<1x4xf32>
    %102 = arith.addf %95, %101 : vector<1x4xf32>
    %c0_33 = arith.constant 0 : index
    %c0_34 = arith.constant 0 : index
    %103 = vector.load %arg5[%c0_33, %c0_34] : memref<1x4xf32, #tpu.memory_space<vmem>>, vector<1x4xf32>
    %104 = arith.addf %103, %102 : vector<1x4xf32>
    %c0_35 = arith.constant 0 : index
    %c0_36 = arith.constant 0 : index
    %105 = vector.load %arg5[%c0_35, %c0_36] : memref<1x4xf32, #tpu.memory_space<vmem>>, vector<1x4xf32>
    tpu.vector_store %arg5[%c0_35, %c0_36], %104 {strides = array<i32>} : memref<1x4xf32, #tpu.memory_space<vmem>>, vector<1x4xf32>,
    return
  }
  func.func @transform_0(%arg0: i32) -> (i32, i32) {
    %c0_i32 = arith.constant 0 : i32
    %0 = arith.minsi %arg0, %c0_i32 : i32
    %c0_i32_0 = arith.constant 0 : i32
    %c0_i32_1 = arith.constant 0 : i32
    return %0, %c0_i32_0 : i32, i32
  }
  func.func @transform_1(%arg0: i32) -> (i32, i32) {
    %c0_i32 = arith.constant 0 : i32
    %0 = arith.minsi %arg0, %c0_i32 : i32
    %c0_i32_0 = arith.constant 0 : i32
    %c0_i32_1 = arith.constant 0 : i32
    return %0, %c0_i32_0 : i32, i32
  }
  func.func @transform_2(%arg0: i32) -> (i32, i32) {
    %c0_i32 = arith.constant 0 : i32
    %0 = arith.minsi %arg0, %c0_i32 : i32
    %c0_i32_0 = arith.constant 0 : i32
    %c0_i32_1 = arith.constant 0 : i32
    return %0, %c0_i32_0 : i32, i32
  }
  func.func @transform_3(%arg0: i32) -> (i32, i32) {
    %c0_i32 = arith.constant 0 : i32
    %0 = arith.minsi %arg0, %c0_i32 : i32
    %c0_i32_0 = arith.constant 0 : i32
    %c0_i32_1 = arith.constant 0 : i32
    return %0, %c0_i32_0 : i32, i32
  }
  func.func @transform_4(%arg0: i32) -> (i32, i32) {
    %c0_i32 = arith.constant 0 : i32
    %c0_i32_0 = arith.constant 0 : i32
    %c0_i32_1 = arith.constant 0 : i32
    return %c0_i32, %c0_i32_0 : i32, i32
  }
}

</mosaic_0001>

<llo_original>
// kernel: attention_cross_entropy_loss.1
$region0: #{attention_cross_entropy_loss.1}
  #allocation0 [shape = 'u32[]', space=smem, size = 0x4, offset = 0x4, fixed_abs, tag = 'smem constant byte address 0x4 - core index']
  #allocation1 [shape = 'u32[72,128]{1,0:T(1,128)}', space=vmem, size = 0x9000, scoped, tag = 'internal scratch']
  %s0 = inlined_call_operand.vmem [shape: f32[2,10], index: 0, kind: input, shape index: {}]
  %s1 = inlined_call_operand.vmem [shape: s32[2,1], index: 1, kind: input, shape index: {}]
  %s2 = inlined_call_operand.vmem [shape: f32[8,8], index: 2, kind: input, shape index: {}]
  %s3 = inlined_call_operand.vmem [shape: s32[8,1], index: 3, kind: input, shape index: {}]
  %s4 = inlined_call_operand.vmem [shape: f32[1,4], index: 4, kind: output, shape index: {}]
  %s5 = sld [smem:[#allocation0]]
  $region30: #{attention_cross_entropy_loss.1} parent=0
    _
  %s7 = ssub.s32 1, %s5
  %s8 = scalar_select 0, %s7, %s5
  // Predicated region
  $region2: #{attention_cross_entropy_loss.1} parent=0 // pred_check
    _
  $region3: #{attention_cross_entropy_loss.1} parent=0 // pred_check_branch
    %10 = sbr.rel (0) target = $region5
  $region4: #{attention_cross_entropy_loss.1} parent=0 // pred_region
    _
  $region5: #{attention_cross_entropy_loss.1} parent=0 // pred_fallthru
    _
  // Predicated region
  $region6: #{attention_cross_entropy_loss.1} parent=0 // pred_check
    _
  $region7: #{attention_cross_entropy_loss.1} parent=0 // pred_check_branch
    %12 = sbr.rel (0) target = $region9
  $region8: #{attention_cross_entropy_loss.1} parent=0 // pred_region
    _
  $region9: #{attention_cross_entropy_loss.1} parent=0 // pred_fallthru
    _
  // Predicated region
  $region10: #{attention_cross_entropy_loss.1} parent=0 // pred_check
    _
  $region11: #{attention_cross_entropy_loss.1} parent=0 // pred_check_branch
    %14 = sbr.rel (0) target = $region13
  $region12: #{attention_cross_entropy_loss.1} parent=0 // pred_region
    _
  $region13: #{attention_cross_entropy_loss.1} parent=0 // pred_fallthru
    _
  // Predicated region
  $region14: #{attention_cross_entropy_loss.1} parent=0 // pred_check
    _
  $region15: #{attention_cross_entropy_loss.1} parent=0 // pred_check_branch
    %16 = sbr.rel (0) target = $region17
  $region16: #{attention_cross_entropy_loss.1} parent=0 // pred_region
    _
  $region17: #{attention_cross_entropy_loss.1} parent=0 // pred_fallthru
    _
  %p17 = scmp.eq.s32.totalorder 0, 0
  // Predicated region
  $region18: #{attention_cross_entropy_loss.1} parent=0 // pred_check
    %p18 = pneg %p17
  $region19: #{attention_cross_entropy_loss.1} parent=0 // pred_check_branch
    %20 = sbr.rel (%p18) target = $region21
  $region20: #{attention_cross_entropy_loss.1} parent=0 // pred_region
    %vm21 = vcmask 24576
    %22 = vst.msk [vmem:[%s4] sm:$0x1] %vm21, 0.0
  $region21: #{attention_cross_entropy_loss.1} parent=0 // pred_fallthru
    _
  %s23 = smul.u32 0, 2
  %v24 = vld [vmem:[%s0] sm:$0x3]
  %v25 = vld [vmem:[%s1] sm:$0x3]
  %v26 = vlaneseq
  %v27 = vshrl.u32 %v26, 7
  %v28 = vstv %s23
  %v29 = vadd.s32 %v28, %v27
  %vm30 = vcmp.lt.s32.totalorder %v29, 2
  %vm31 = vcmask 74752
  %v32 = vsel %vm31, %v24, -inf
  %33 = vmax.xlane.f32.xlu0 %v32
  %v34 = vpop.xlane.xlu0 %33
  %v35 = vsub.f32 %v24, %v34
  %v36 = vmul.f32 %v35, 1.442695
  %v37 = vpow.pop %v36
  %v38 = vsel %vm31, %v37, 0.0
  %39 = vadd.xlane.f32.xlu0 %v38
  %v40 = vpop.xlane.xlu0 %39
  %v41 = vlog2.pop %v40
  %v42 = vmul.f32 %v41, 0.6931472
  %v43 = vadd.f32 %v34, %v42
  %v44 = vlaneseq
  %v45 = vand.u32 %v44, 127
  %46 = vset.pattern.permute.xlu0 0
  %47 = vperm.xlu0 %46, %v25
  %v48 = vpop.permute.xlu0 %47
  %vm49 = vcmp.eq.s32.totalorder %v45, %v48
  %v50 = vsel %vm49, %v24, 0.0
  %v51 = vsel %vm31, %v50, 0.0
  %52 = vadd.xlane.f32.xlu0 %v51
  %v53 = vpop.xlane.xlu0 %52
  %v54 = vsub.f32 %v43, %v53
  %vm55 = vcmp.ge.f32.partialorder %v53, %v34
  %vm56 = vmand %vm30, %vm55
  %v57 = vsel %vm30, %v54, 0.0
  %vm58 = vcmask 1041408
  %v59 = vsel %vm58, %v57, 0.0
  %v60 = vrot.slane %v59, 4
  %v61 = vadd.f32 %v59, %v60
  %v62 = vrot.slane %v61, 2
  %v63 = vadd.f32 %v61, %v62
  %v64 = vrot.slane %v63, 1
  %v65 = vadd.f32 %v63, %v64
  %v66 = vsel %vm56, 1.0, 0.0
  %v67 = vsel %vm58, %v66, 0.0
  %v68 = vrot.slane %v67, 4
  %v69 = vadd.f32 %v67, %v68
  %v70 = vrot.slane %v69, 2
  %v71 = vadd.f32 %v69, %v70
  %v72 = vrot.slane %v71, 1
  %v73 = vadd.f32 %v71, %v72
  %s74 = smul.u32 0, 8
  %v75 = vld [vmem:[%s2] sm:$0xff]
  %v76 = vld [vmem:[%s3] sm:$0xff]
  %v77 = vstv %s74
  %v78 = vadd.s32 %v77, %v27
  %vm79 = vcmp.lt.s32.totalorder %v78, 8
  %vm80 = vcmask 64512
  %v81 = vsel %vm80, %v75, -inf
  %82 = vmax.xlane.f32.xlu0 %v81
  %v83 = vpop.xlane.xlu0 %82
  %v84 = vsub.f32 %v75, %v83
  %v85 = vmul.f32 %v84, 1.442695
  %v86 = vpow.pop %v85
  %v87 = vsel %vm80, %v86, 0.0
  %88 = vadd.xlane.f32.xlu0 %v87
  %v89 = vpop.xlane.xlu0 %88
  %v90 = vlog2.pop %v89
  %v91 = vmul.f32 %v90, 0.6931472
  %v92 = vadd.f32 %v83, %v91
  %93 = vset.pattern.permute.xlu0 0
  %94 = vperm.xlu0 %93, %v76
  %v95 = vpop.permute.xlu0 %94
  %vm96 = vcmp.eq.s32.totalorder %v45, %v95
  %v97 = vsel %vm96, %v75, 0.0
  %v98 = vsel %vm80, %v97, 0.0
  %99 = vadd.xlane.f32.xlu0 %v98
  %v100 = vpop.xlane.xlu0 %99
  %v101 = vsub.f32 %v92, %v100
  %vm102 = vcmp.ge.f32.partialorder %v100, %v83
  %vm103 = vmand %vm79, %vm102
  %v104 = vsel %vm79, %v101, 0.0
  %v105 = vrot.slane %v104, 4
  %v106 = vadd.f32 %v104, %v105
  %v107 = vrot.slane %v106, 2
  %v108 = vadd.f32 %v106, %v107
  %v109 = vrot.slane %v108, 1
  %v110 = vadd.f32 %v108, %v109
  %v111 = vsel %vm103, 1.0, 0.0
  %v112 = vrot.slane %v111, 4
  %v113 = vadd.f32 %v111, %v112
  %v114 = vrot.slane %v113, 2
  %v115 = vadd.f32 %v113, %v114
  %v116 = vrot.slane %v115, 1
  %v117 = vadd.f32 %v115, %v116
  %vm118 = vcmp.eq.s32.totalorder %v45, 0
  %v119 = vsel %vm118, %v65, 0.0
  %vm120 = vcmp.eq.s32.totalorder %v45, 1
  %v121 = vsel %vm120, %v110, 0.0
  %v122 = vadd.f32 %v119, %v121
  %vm123 = vcmp.eq.s32.totalorder %v45, 2
  %v124 = vsel %vm123, %v73, 0.0
  %v125 = vadd.f32 %v122, %v124
  %vm126 = vcmp.eq.s32.totalorder %v45, 3
  %v127 = vsel %vm126, %v117, 0.0
  %v128 = vadd.f32 %v125, %v127
  %v129 = vld [vmem:[%s4] sm:$0x1]
  %v130 = vadd.f32 %v129, %v128
  %vm131 = vcmask 24576
  %132 = vst.msk [vmem:[%s4] sm:$0x1] %vm131, %v130
  // Predicated region
  $region22: #{attention_cross_entropy_loss.1} parent=0 // pred_check
    _
  $region23: #{attention_cross_entropy_loss.1} parent=0 // pred_check_branch
    %134 = sbr.rel (0) target = $region25
  $region24: #{attention_cross_entropy_loss.1} parent=0 // pred_region
    _
  $region25: #{attention_cross_entropy_loss.1} parent=0 // pred_fallthru
    _
  // Predicated region
  $region26: #{attention_cross_entropy_loss.1} parent=0 // pred_check
    _
  $region27: #{attention_cross_entropy_loss.1} parent=0 // pred_check_branch
    %136 = sbr.rel (0) target = $region29
  $region28: #{attention_cross_entropy_loss.1} parent=0 // pred_region
    _
  $region29: #{attention_cross_entropy_loss.1} parent=0 // pred_fallthru
    _

</llo_original>
